<compile_context>
chip_gen: v6e
topology: v6e:2x2x1
jax: 0.10.0
libtpu: 0.0.40
codegen_flags: <defaults>
</compile_context>

<pallas_src>
import functools

import numpy as np
import jax
import jax.numpy as jnp
from jax import lax
from jax.experimental import pallas as pl
from jax.experimental.pallas import tpu as pltpu

NEG_SLOPE = -0.2  # nn.LeakyReLU(-0.2) — negative slope is literally -0.2


def _leaky(x):
    # LeakyReLU: x if x >= 0 else slope * x  (matches PyTorch semantics)
    return jnp.where(x >= 0, x, NEG_SLOPE * x)


def _unet_block_kernel(x_ref, w1_ref, b1_ref, w2_ref, b2_ref, o_ref, *, img_h):
    """One batch-block per grid step.  Lane axis carries W*C; sublanes carry
    Bblk*H rows.

    x_ref  : (rows, W*Cin)        bf16   rows = Bblk * img_h
    w1_ref : (3*W*Cin,  W*Cout)   bf16   dy taps stacked along K (+ W padding)
    b1_ref : (1, W*Cout)          f32    conv1 bias tiled over W
    w2_ref : (3*W*Cout, W*Cout)   bf16
    b2_ref : (1, W*Cout)          f32
    o_ref  : (rows, W*Cout)       f32 or bf16, lane-dense
    """
    rows = x_ref.shape[0]

    # Per-image row index -> masks for the +/-1 row shifts (zero padding along
    # H, and no leakage between the Bblk images packed into this block).
    row_in_img = lax.broadcasted_iota(jnp.int32, (rows, 1), 0) % img_h
    has_up = row_in_img != 0              # a valid row above (same image)
    has_dn = row_in_img != (img_h - 1)    # a valid row below (same image)

    def conv3x3(a, w_ref, b_row):
        # a: (rows, K) activations; w_ref: (3K, N); b_row: (1, N) f32.
        k = a.shape[1]
        zrow = jnp.zeros((1, k), a.dtype)
        up = jnp.concatenate([zrow, a[: rows - 1, :]], axis=0)   # row r-1
        dn = jnp.concatenate([a[1:, :], zrow], axis=0)           # row r+1
        up = jnp.where(has_up, up, jnp.zeros_like(up))
        dn = jnp.where(has_dn, dn, jnp.zeros_like(dn))
        # Fuse the three dy taps into a single MXU push (K -> 3K).
        a3 = jnp.concatenate([up, a, dn], axis=1)                # (rows, 3K)
        acc = jnp.dot(a3, w_ref[...], preferred_element_type=jnp.float32)
        return _leaky(acc + b_row)                               # f32 (rows, N)

    x = x_ref[...]                                   # bf16, no f32 round trip
    y1 = conv3x3(x, w1_ref, b1_ref[...])             # f32, stays in vregs
    y2 = conv3x3(y1.astype(jnp.bfloat16), w2_ref, b2_ref[...])
    o_ref[...] = y2.astype(o_ref.dtype)


# --------------------------- parameter folding ------------------------------

def _tap_matrix(w_oihw, width):
    """OIHW 3x3 conv weights -> (3*width*Cin, width*Cout) bf16 matrix.

    Row index = (dy, wi, ci), col index = (wo, co);
    M = w[co, ci, dy, wi - wo + 1] when the W tap is in range, else 0
    (realizes both the W taps and padding=1 along W).  The dy slabs are
    stacked along K so a single matmul consumes [up, center, dn].
    """
    cout, cin = w_oihw.shape[0], w_oihw.shape[1]
    w_hwio = jnp.transpose(w_oihw, (2, 3, 1, 0))            # (3, 3, Cin, Cout)
    wi = np.arange(width)[:, None]
    wo = np.arange(width)[None, :]
    p = np.stack([(wi == wo + dx - 1) for dx in range(3)]).astype(np.float32)
    m = jnp.einsum("xiw,yxcf->yicwf", jnp.asarray(p), w_hwio)  # (3,W,Cin,W,Cout)
    return m.reshape(3 * width * cin, width * cout).astype(jnp.bfloat16)


def fold_params(w1_oihw, b1, w2_oihw, b2, width):
    """Parameter-only folding.  Call ONCE (outside the per-forward path)."""
    cout = w1_oihw.shape[0]
    m1 = _tap_matrix(w1_oihw, width)                          # (3*W*Cin,  W*Cout)
    m2 = _tap_matrix(w2_oihw, width)                          # (3*W*Cout, W*Cout)
    b1t = jnp.tile(b1.astype(jnp.float32), width).reshape(1, width * cout)
    b2t = jnp.tile(b2.astype(jnp.float32), width).reshape(1, width * cout)
    return m1, b1t, m2, b2t


def _pick_bblk(batch, img_h, rows_target=256):
    """Largest divisor of batch with bblk*H <= rows_target (sublane aligned)."""
    best = batch  # full batch is always a legal block (block == full extent)
    for d in range(1, batch + 1):
        if batch % d:
            continue
        rows = d * img_h
        if rows <= max(rows_target, img_h) and (rows % 8 == 0 or d == batch):
            best = d
    return best


# ------------------------------ forward passes -------------------------------

def unet_block_lane_dense(x2d, folded, *, img_h, out_dtype=jnp.float32,
                          rows_target=256):
    """Lane-dense forward: x2d (B*H, W*Cin) bf16 -> (B*H, W*Cout) out_dtype.

    This is the production-chaining path (no NCHW transposes, bf16 output
    possible to halve writeback).
    """
    m1, b1t, m2, b2t = folded
    total_rows, k_in = x2d.shape
    n = m1.shape[1]
    batch = total_rows // img_h
    bblk = _pick_bblk(batch, img_h, rows_target)
    rows_blk = bblk * img_h
    grid = (batch // bblk,)

    flops = 2 * total_rows * (m1.shape[0] * n + m2.shape[0] * n)
    bytes_accessed = (x2d.size * 2 + m1.size * 2 + m2.size * 2
                      + (b1t.size + b2t.size) * 4
                      + total_rows * n * jnp.dtype(out_dtype).itemsize)

    kernel = functools.partial(_unet_block_kernel, img_h=img_h)
    return pl.pallas_call(
        kernel,
        out_shape=jax.ShapeDtypeStruct((total_rows, n), out_dtype),
        grid=grid,
        in_specs=[
            pl.BlockSpec((rows_blk, k_in), lambda i: (i, 0)),
            pl.BlockSpec(m1.shape, lambda i: (0, 0)),
            pl.BlockSpec(b1t.shape, lambda i: (0, 0)),
            pl.BlockSpec(m2.shape, lambda i: (0, 0)),
            pl.BlockSpec(b2t.shape, lambda i: (0, 0)),
        ],
        out_specs=pl.BlockSpec((rows_blk, n), lambda i: (i, 0)),
        compiler_params=pltpu.CompilerParams(
            dimension_semantics=("parallel",)),
        cost_estimate=pl.CostEstimate(flops=int(flops), transcendentals=0,
                                      bytes_accessed=int(bytes_accessed)),
    )(x2d, m1, b1t, m2, b2t)


def very_simple_unet_block(x_nchw, folded, out_dtype=jnp.float32):
    """PyTorch-parity wrapper: NCHW f32 in -> NCHW out (default f32).

    `folded` = fold_params(w1, b1, w2, b2, W), computed once by the caller.
    """
    B, Cin, H, W = x_nchw.shape
    m1, b1t, _, _ = folded
    Cout = b1t.shape[1] // W
    assert m1.shape[0] == 3 * W * Cin, "folded params do not match input shape"

    # NCHW -> lane-dense (B*H, W*Cin), channels minor within each w; bf16 MXU feed.
    x2d = jnp.transpose(x_nchw, (0, 2, 3, 1)).reshape(B * H, W * Cin)
    x2d = x2d.astype(jnp.bfloat16)

    out2d = unet_block_lane_dense(x2d, folded, img_h=H, out_dtype=out_dtype)
    return jnp.transpose(out2d.reshape(B, H, W, Cout), (0, 3, 1, 2))


# ------------------------------- references ---------------------------------

def _reference(x_nchw, w1, b1, w2, b2):
    """Pure-JAX f32 reference (matches PyTorch conv2d + LeakyReLU(-0.2))."""
    dn = ("NCHW", "OIHW", "NCHW")
    y = lax.conv_general_dilated(x_nchw, w1, (1, 1), ((1, 1), (1, 1)),
                                 dimension_numbers=dn,
                                 precision=lax.Precision.HIGHEST)
    y = _leaky(y + b1[None, :, None, None])
    y = lax.conv_general_dilated(y, w2, (1, 1), ((1, 1), (1, 1)),
                                 dimension_numbers=dn,
                                 precision=lax.Precision.HIGHEST)
    y = _leaky(y + b2[None, :, None, None])
    return y


def _reference_bf16_quantized(x_nchw, w1, b1, w2, b2):
    """Mirrors the kernel's bf16 operand rounding with f32 accumulation."""
    bf = lambda a: a.astype(jnp.bfloat16).astype(jnp.float32)
    dn = ("NCHW", "OIHW", "NCHW")
    y = lax.conv_general_dilated(bf(x_nchw), bf(w1), (1, 1), ((1, 1), (1, 1)),
                                 dimension_numbers=dn,
                                 precision=lax.Precision.HIGHEST)
    y = _leaky(y + b1[None, :, None, None])
    y = lax.conv_general_dilated(bf(y), bf(w2), (1, 1), ((1, 1), (1, 1)),
                                 dimension_numbers=dn,
                                 precision=lax.Precision.HIGHEST)
    y = _leaky(y + b2[None, :, None, None])
    return y


if __name__ == "__main__":
    B, Cin, Cout, H, W = 2, 4, 8, 16, 16

    key = jax.random.PRNGKey(0)
    k_x, k_w1, k_b1, k_w2, k_b2 = jax.random.split(key, 5)

    x = jax.random.normal(k_x, (B, Cin, H, W), jnp.float32)

    # Deterministic synthetic params (PyTorch-like small uniform init).
    bound1 = 1.0 / (Cin * 9) ** 0.5
    bound2 = 1.0 / (Cout * 9) ** 0.5
    w1 = jax.random.uniform(k_w1, (Cout, Cin, 3, 3), jnp.float32, -bound1, bound1)
    b1 = jax.random.uniform(k_b1, (Cout,), jnp.float32, -bound1, bound1)
    w2 = jax.random.uniform(k_w2, (Cout, Cout, 3, 3), jnp.float32, -bound2, bound2)
    b2 = jax.random.uniform(k_b2, (Cout,), jnp.float32, -bound2, bound2)

    # Fold parameters once, outside the per-call path.
    folded = jax.block_until_ready(fold_params(w1, b1, w2, b2, W))

    fwd = jax.jit(very_simple_unet_block)
    out = jax.block_until_ready(fwd(x, folded))
    assert out.shape == (B, Cout, H, W)

    # Tight structural check vs a reference using the same bf16-rounded
    # operands (isolates structure from bf16 quantization noise).
    ref_q = _reference_bf16_quantized(x, w1, b1, w2, b2)
    err_q = float(jnp.max(jnp.abs(out - ref_q)))
    assert jnp.allclose(out, ref_q, atol=2e-3, rtol=2e-3), \
        f"structural mismatch: {err_q}"

    # Loose sanity check vs the pure f32 PyTorch-equivalent reference
    # (bf16 MXU operands => ~1e-2 level deviations expected).
    ref = _reference(x, w1, b1, w2, b2)
    err = float(jnp.max(jnp.abs(out - ref)))
    assert jnp.allclose(out, ref, atol=5e-2, rtol=5e-2), \
        f"mismatch vs f32 reference: {err}"

    # Production chaining path: lane-dense bf16 output (no NCHW transpose,
    # half the writeback).  Smoke-check it against the f32 result.
    x2d = jnp.transpose(x, (0, 2, 3, 1)).reshape(B * H, W * Cin).astype(jnp.bfloat16)
    out_ld = jax.block_until_ready(
        unet_block_lane_dense(x2d, folded, img_h=H, out_dtype=jnp.bfloat16))
    assert out_ld.shape == (B * H, W * Cout)
    out_nhwc = jnp.transpose(out, (0, 2, 3, 1)).reshape(B * H, W * Cout)
    assert jnp.allclose(out_ld.astype(jnp.float32), out_nhwc,
                        atol=1e-2, rtol=1e-2), "lane-dense bf16 path mismatch"

    print("KERNEL_OK")
</pallas_src>

<mosaic_0001>
module attributes {stable_mosaic.version = 11 : i64} {
  func.func @_unet_block_kernel(%arg0: i32, %arg1: memref<32x64xbf16, #tpu.memory_space<vmem>>, %arg2: memref<192x128xbf16, #tpu.memory_space<vmem>>, %arg3: memref<1x128xf32, #tpu.memory_space<vmem>>, %arg4: memref<384x128xbf16, #tpu.memory_space<vmem>>, %arg5: memref<1x128xf32, #tpu.memory_space<vmem>>, %arg6: memref<32x128xf32, #tpu.memory_space<vmem>>) attributes {dimension_semantics = [#tpu.dimension_semantics<parallel>], iteration_bounds = array<i64: 1>, scalar_prefetch = 0 : i64, scratch_operands = 0 : i64, tpu.core_type = #tpu.core_type<tc>, window_params = [{transform_indices = @transform_0, window_bounds = array<i64: 32, 64>}, {pipeline_mode = #tpu.pipeline_mode<synchronous>, transform_indices = @transform_1, window_bounds = array<i64: 192, 128>}, {pipeline_mode = #tpu.pipeline_mode<synchronous>, transform_indices = @transform_2, window_bounds = array<i64: 1, 128>}, {pipeline_mode = #tpu.pipeline_mode<synchronous>, transform_indices = @transform_3, window_bounds = array<i64: 384, 128>}, {pipeline_mode = #tpu.pipeline_mode<synchronous>, transform_indices = @transform_4, window_bounds = array<i64: 1, 128>}, {transform_indices = @transform_5, window_bounds = array<i64: 32, 128>}]} {
    %0 = tpu.iota {dimensions = array<i32: 0>} : vector<32x1xi32>
    %c16_i32 = arith.constant 16 : i32
    %c0_i32 = arith.constant 0 : i32
    %1 = arith.cmpi eq, %c16_i32, %c0_i32 : i32
    %c1_i32 = arith.constant 1 : i32
    %2 = arith.select %1, %c1_i32, %c16_i32 : i32
    %3 = vector.broadcast %2 : i32 to vector<32x1xi32>
    %4 = arith.remsi %0, %3 : vector<32x1xi32>
    %c0_i32_0 = arith.constant 0 : i32
    %5 = vector.broadcast %c0_i32_0 : i32 to vector<32x1xi32>
    %6 = arith.cmpi ne, %4, %5 : vector<32x1xi32>
    %c0_i32_1 = arith.constant 0 : i32
    %7 = vector.broadcast %c0_i32_1 : i32 to vector<32x1xi32>
    %8 = arith.cmpi slt, %4, %7 : vector<32x1xi32>
    %c0_i32_2 = arith.constant 0 : i32
    %9 = arith.cmpi slt, %2, %c0_i32_2 : i32
    %10 = vector.broadcast %9 : i1 to vector<32x1xi1>
    %11 = vector.broadcast %10 : vector<32x1xi1> to vector<32x1xi1>
    %12 = arith.xori %8, %11 : vector<32x1xi1>
    %13 = arith.andi %12, %6 : vector<32x1xi1>
    %14 = vector.broadcast %2 : i32 to vector<32x1xi32>
    %15 = arith.addi %4, %14 : vector<32x1xi32>
    %16 = arith.select %13, %15, %4 : vector<32x1xi1>, vector<32x1xi32>
    %c0_i32_3 = arith.constant 0 : i32
    %17 = vector.broadcast %c0_i32_3 : i32 to vector<32x1xi32>
    %18 = arith.cmpi ne, %16, %17 : vector<32x1xi32>
    %c15_i32 = arith.constant 15 : i32
    %19 = vector.broadcast %c15_i32 : i32 to vector<32x1xi32>
    %20 = arith.cmpi ne, %16, %19 : vector<32x1xi32>
    %c0 = arith.constant 0 : index
    %c0_4 = arith.constant 0 : index
    %21 = vector.load %arg1[%c0, %c0_4] : memref<32x64xbf16, #tpu.memory_space<vmem>>, vector<32x64xbf16>
    %c0_5 = arith.constant 0 : index
    %c0_6 = arith.constant 0 : index
    %22 = vector.load %arg3[%c0_5, %c0_6] : memref<1x128xf32, #tpu.memory_space<vmem>>, vector<1x128xf32>
    %cst = arith.constant 0.000000e+00 : bf16
    %23 = vector.broadcast %cst : bf16 to vector<1x64xbf16>
    %24 = vector.extract_strided_slice %21 {offsets = [0, 0], sizes = [31, 64], strides = [1, 1]} : vector<32x64xbf16> to vector<31x64xbf16>
    %25 = tpu.concatenate %23, %24 in 0 : vector<1x64xbf16>, vector<31x64xbf16> -> vector<32x64xbf16>
    %26 = vector.extract_strided_slice %21 {offsets = [1, 0], sizes = [31, 64], strides = [1, 1]} : vector<32x64xbf16> to vector<31x64xbf16>
    %27 = tpu.concatenate %26, %23 in 0 : vector<31x64xbf16>, vector<1x64xbf16> -> vector<32x64xbf16>
    %cst_7 = arith.constant 0.000000e+00 : bf16
    %28 = vector.broadcast %cst_7 : bf16 to vector<32x64xbf16>
    %29 = vector.shape_cast %18 : vector<32x1xi1> to vector<32x1xi1>
    %30 = vector.broadcast %29 : vector<32x1xi1> to vector<32x64xi1>
    %31 = arith.select %30, %25, %28 : vector<32x64xi1>, vector<32x64xbf16>
    %cst_8 = arith.constant 0.000000e+00 : bf16
    %32 = vector.broadcast %cst_8 : bf16 to vector<32x64xbf16>
    %33 = vector.shape_cast %20 : vector<32x1xi1> to vector<32x1xi1>
    %34 = vector.broadcast %33 : vector<32x1xi1> to vector<32x64xi1>
    %35 = arith.select %34, %27, %32 : vector<32x64xi1>, vector<32x64xbf16>
    %36 = tpu.concatenate %31, %21, %35 in 1 : vector<32x64xbf16>, vector<32x64xbf16>, vector<32x64xbf16> -> vector<32x192xbf16>
    %c0_9 = arith.constant 0 : index
    %c0_10 = arith.constant 0 : index
    %37 = vector.load %arg2[%c0_9, %c0_10] : memref<192x128xbf16, #tpu.memory_space<vmem>>, vector<192x128xbf16>
    %cst_11 = arith.constant dense<0.000000e+00> : vector<32x128xf32>
    %38 = tpu.matmul %36, %37, %cst_11 {dimension_numbers = #tpu.dot_dimension_numbers<[1], [0], [0], [1], [0, 0, 1, 1], [], []>} : vector<32x192xbf16>, vector<192x128xbf16>, vector<32x128xf32> -> vector<32x128xf32>
    %39 = vector.broadcast %22 : vector<1x128xf32> to vector<32x128xf32>
    %40 = arith.addf %38, %39 : vector<32x128xf32>
    %cst_12 = arith.constant 0.000000e+00 : f32
    %41 = vector.broadcast %cst_12 : f32 to vector<32x128xf32>
    %42 = arith.cmpf oge, %40, %41 : vector<32x128xf32>
    %cst_13 = arith.constant -2.000000e-01 : f32
    %43 = vector.broadcast %cst_13 : f32 to vector<32x128xf32>
    %44 = arith.mulf %43, %40 : vector<32x128xf32>
    %45 = arith.select %42, %40, %44 : vector<32x128xi1>, vector<32x128xf32>
    %46 = arith.truncf %45 : vector<32x128xf32> to vector<32x128xbf16>
    %c0_14 = arith.constant 0 : index
    %c0_15 = arith.constant 0 : index
    %47 = vector.load %arg5[%c0_14, %c0_15] : memref<1x128xf32, #tpu.memory_space<vmem>>, vector<1x128xf32>
    %cst_16 = arith.constant 0.000000e+00 : bf16
    %48 = vector.broadcast %cst_16 : bf16 to vector<1x128xbf16>
    %49 = vector.extract_strided_slice %46 {offsets = [0, 0], sizes = [31, 128], strides = [1, 1]} : vector<32x128xbf16> to vector<31x128xbf16>
    %50 = tpu.concatenate %48, %49 in 0 : vector<1x128xbf16>, vector<31x128xbf16> -> vector<32x128xbf16>
    %51 = vector.extract_strided_slice %46 {offsets = [1, 0], sizes = [31, 128], strides = [1, 1]} : vector<32x128xbf16> to vector<31x128xbf16>
    %52 = tpu.concatenate %51, %48 in 0 : vector<31x128xbf16>, vector<1x128xbf16> -> vector<32x128xbf16>
    %cst_17 = arith.constant 0.000000e+00 : bf16
    %53 = vector.broadcast %cst_17 : bf16 to vector<32x128xbf16>
    %54 = vector.shape_cast %18 : vector<32x1xi1> to vector<32x1xi1>
    %55 = vector.broadcast %54 : vector<32x1xi1> to vector<32x128xi1>
    %56 = arith.select %55, %50, %53 : vector<32x128xi1>, vector<32x128xbf16>
    %cst_18 = arith.constant 0.000000e+00 : bf16
    %57 = vector.broadcast %cst_18 : bf16 to vector<32x128xbf16>
    %58 = vector.shape_cast %20 : vector<32x1xi1> to vector<32x1xi1>
    %59 = vector.broadcast %58 : vector<32x1xi1> to vector<32x128xi1>
    %60 = arith.select %59, %52, %57 : vector<32x128xi1>, vector<32x128xbf16>
    %61 = tpu.concatenate %56, %46, %60 in 1 : vector<32x128xbf16>, vector<32x128xbf16>, vector<32x128xbf16> -> vector<32x384xbf16>
    %c0_19 = arith.constant 0 : index
    %c0_20 = arith.constant 0 : index
    %62 = vector.load %arg4[%c0_19, %c0_20] : memref<384x128xbf16, #tpu.memory_space<vmem>>, vector<384x128xbf16>
    %cst_21 = arith.constant dense<0.000000e+00> : vector<32x128xf32>
    %63 = tpu.matmul %61, %62, %cst_21 {dimension_numbers = #tpu.dot_dimension_numbers<[1], [0], [0], [1], [0, 0, 1, 1], [], []>} : vector<32x384xbf16>, vector<384x128xbf16>, vector<32x128xf32> -> vector<32x128xf32>
    %64 = vector.broadcast %47 : vector<1x128xf32> to vector<32x128xf32>
    %65 = arith.addf %63, %64 : vector<32x128xf32>
    %cst_22 = arith.constant 0.000000e+00 : f32
    %66 = vector.broadcast %cst_22 : f32 to vector<32x128xf32>
    %67 = arith.cmpf oge, %65, %66 : vector<32x128xf32>
    %cst_23 = arith.constant -2.000000e-01 : f32
    %68 = vector.broadcast %cst_23 : f32 to vector<32x128xf32>
    %69 = arith.mulf %68, %65 : vector<32x128xf32>
    %70 = arith.select %67, %65, %69 : vector<32x128xi1>, vector<32x128xf32>
    %c0_24 = arith.constant 0 : index
    %c0_25 = arith.constant 0 : index
    %71 = vector.load %arg6[%c0_24, %c0_25] : memref<32x128xf32, #tpu.memory_space<vmem>>, vector<32x128xf32>
    tpu.vector_store %arg6[%c0_24, %c0_25], %70 {strides = array<i32>} : memref<32x128xf32, #tpu.memory_space<vmem>>, vector<32x128xf32>,
    return
  }
  func.func @transform_0(%arg0: i32) -> (i32, i32) {
    %c0_i32 = arith.constant 0 : i32
    %c0_i32_0 = arith.constant 0 : i32
    return %arg0, %c0_i32 : i32, i32
  }
  func.func @transform_1(%arg0: i32) -> (i32, i32) {
    %c0_i32 = arith.constant 0 : i32
    %c0_i32_0 = arith.constant 0 : i32
    %c0_i32_1 = arith.constant 0 : i32
    return %c0_i32, %c0_i32_0 : i32, i32
  }
  func.func @transform_2(%arg0: i32) -> (i32, i32) {
    %c0_i32 = arith.constant 0 : i32
    %c0_i32_0 = arith.constant 0 : i32
    %c0_i32_1 = arith.constant 0 : i32
    return %c0_i32, %c0_i32_0 : i32, i32
  }
  func.func @transform_3(%arg0: i32) -> (i32, i32) {
    %c0_i32 = arith.constant 0 : i32
    %c0_i32_0 = arith.constant 0 : i32
    %c0_i32_1 = arith.constant 0 : i32
    return %c0_i32, %c0_i32_0 : i32, i32
  }
  func.func @transform_4(%arg0: i32) -> (i32, i32) {
    %c0_i32 = arith.constant 0 : i32
    %c0_i32_0 = arith.constant 0 : i32
    %c0_i32_1 = arith.constant 0 : i32
    return %c0_i32, %c0_i32_0 : i32, i32
  }
  func.func @transform_5(%arg0: i32) -> (i32, i32) {
    %c0_i32 = arith.constant 0 : i32
    %c0_i32_0 = arith.constant 0 : i32
    return %arg0, %c0_i32 : i32, i32
  }
}

</mosaic_0001>

<llo_original>
// kernel: very_simple_unet_block.1
$region0: #{very_simple_unet_block.1}
  #allocation0 [shape = 'u32[]', space=smem, size = 0x4, offset = 0x4, fixed_abs, tag = 'smem constant byte address 0x4 - core index']
  #allocation1 [shape = 'u32[144,128]{1,0:T(1,128)}', space=vmem, size = 0x12000, scoped, tag = 'internal scratch']
  %s0 = inlined_call_operand.vmem [shape: bf16[32,64], index: 0, kind: input, shape index: {}]
  %s1 = inlined_call_operand.vmem [shape: bf16[192,128], index: 1, kind: input, shape index: {}]
  %s2 = inlined_call_operand.vmem [shape: f32[1,128], index: 2, kind: input, shape index: {}]
  %s3 = inlined_call_operand.vmem [shape: bf16[384,128], index: 3, kind: input, shape index: {}]
  %s4 = inlined_call_operand.vmem [shape: f32[1,128], index: 4, kind: input, shape index: {}]
  %s5 = inlined_call_operand.vmem [shape: f32[32,128], index: 5, kind: output, shape index: {}]
  %s6 = sld [smem:[#allocation0]]
  $region30: #{very_simple_unet_block.1} parent=0
    _
  %s8 = ssub.s32 1, %s6
  %s9 = scalar_select 0, %s8, %s6
  // Predicated region
  $region2: #{very_simple_unet_block.1} parent=0 // pred_check
    _
  $region3: #{very_simple_unet_block.1} parent=0 // pred_check_branch
    %11 = sbr.rel (0) target = $region5
  $region4: #{very_simple_unet_block.1} parent=0 // pred_region
    _
  $region5: #{very_simple_unet_block.1} parent=0 // pred_fallthru
    _
  // Predicated region
  $region6: #{very_simple_unet_block.1} parent=0 // pred_check
    _
  $region7: #{very_simple_unet_block.1} parent=0 // pred_check_branch
    %13 = sbr.rel (0) target = $region9
  $region8: #{very_simple_unet_block.1} parent=0 // pred_region
    _
  $region9: #{very_simple_unet_block.1} parent=0 // pred_fallthru
    _
  // Predicated region
  $region10: #{very_simple_unet_block.1} parent=0 // pred_check
    _
  $region11: #{very_simple_unet_block.1} parent=0 // pred_check_branch
    %15 = sbr.rel (0) target = $region13
  $region12: #{very_simple_unet_block.1} parent=0 // pred_region
    _
  $region13: #{very_simple_unet_block.1} parent=0 // pred_fallthru
    _
  // Predicated region
  $region14: #{very_simple_unet_block.1} parent=0 // pred_check
    _
  $region15: #{very_simple_unet_block.1} parent=0 // pred_check_branch
    %17 = sbr.rel (0) target = $region17
  $region16: #{very_simple_unet_block.1} parent=0 // pred_region
    _
  $region17: #{very_simple_unet_block.1} parent=0 // pred_fallthru
    _
  // Predicated region
  $region18: #{very_simple_unet_block.1} parent=0 // pred_check
    _
  $region19: #{very_simple_unet_block.1} parent=0 // pred_check_branch
    %19 = sbr.rel (0) target = $region21
  $region20: #{very_simple_unet_block.1} parent=0 // pred_region
    _
  $region21: #{very_simple_unet_block.1} parent=0 // pred_fallthru
    _
  %v23 = vlaneseq
  %v24 = vshrl.u32 %v23, 7
  %v25 = vadd.s32 %v24, 8
  %v26 = vadd.s32 %v24, 16
  %v27 = vadd.s32 %v24, 24
  %vm28 = vcmp.lt.s32.totalorder %v24, 0
  %v29 = vsub.s32 0, %v24
  %v30 = vsel %vm28, %v29, %v24
  %v31 = vshrl.u32 %v30, 4
  %v32 = vand.u32 %v30, 15
  %v33 = vsub.s32 0, %v32
  %v34 = vsel %vm28, %v33, %v32
  %vm35 = vcmp.lt.s32.totalorder %v25, 0
  %v36 = vsub.s32 0, %v25
  %v37 = vsel %vm35, %v36, %v25
  %v38 = vshrl.u32 %v37, 4
  %v39 = vand.u32 %v37, 15
  %v40 = vsub.s32 0, %v39
  %v41 = vsel %vm35, %v40, %v39
  %vm42 = vcmp.lt.s32.totalorder %v26, 0
  %v43 = vsub.s32 0, %v26
  %v44 = vsel %vm42, %v43, %v26
  %v45 = vshrl.u32 %v44, 4
  %v46 = vand.u32 %v44, 15
  %v47 = vsub.s32 0, %v46
  %v48 = vsel %vm42, %v47, %v46
  %vm49 = vcmp.lt.s32.totalorder %v27, 0
  %v50 = vsub.s32 0, %v27
  %v51 = vsel %vm49, %v50, %v27
  %v52 = vshrl.u32 %v51, 4
  %v53 = vand.u32 %v51, 15
  %v54 = vsub.s32 0, %v53
  %v55 = vsel %vm49, %v54, %v53
  %vm56 = vcmp.ne.s32.totalorder %v34, 0
  %vm57 = vcmp.ne.s32.totalorder %v41, 0
  %vm58 = vcmp.ne.s32.totalorder %v48, 0
  %vm59 = vcmp.ne.s32.totalorder %v55, 0
  %vm60 = vcmp.lt.s32.totalorder %v34, 0
  %vm61 = vcmp.lt.s32.totalorder %v41, 0
  %vm62 = vcmp.lt.s32.totalorder %v48, 0
  %vm63 = vcmp.lt.s32.totalorder %v55, 0
  %vm64 = vmand %vm60, %vm56
  %vm65 = vmand %vm61, %vm57
  %vm66 = vmand %vm62, %vm58
  %vm67 = vmand %vm63, %vm59
  %v68 = vadd.s32 %v34, 16
  %v69 = vadd.s32 %v41, 16
  %v70 = vadd.s32 %v48, 16
  %v71 = vadd.s32 %v55, 16
  %v72 = vsel %vm64, %v68, %v34
  %v73 = vsel %vm65, %v69, %v41
  %v74 = vsel %vm66, %v70, %v48
  %v75 = vsel %vm67, %v71, %v55
  %vm76 = vcmp.ne.s32.totalorder %v72, 0
  %vm77 = vcmp.ne.s32.totalorder %v73, 0
  %vm78 = vcmp.ne.s32.totalorder %v74, 0
  %vm79 = vcmp.ne.s32.totalorder %v75, 0
  %vm80 = vcmp.ne.s32.totalorder %v72, 15
  %vm81 = vcmp.ne.s32.totalorder %v73, 15
  %vm82 = vcmp.ne.s32.totalorder %v74, 15
  %vm83 = vcmp.ne.s32.totalorder %v75, 15
  %v84 = vld [vmem:[%s0] sm:$0xf]
  %v85 = vld [vmem:[%s0 + $0x4] sm:$0xf]
  %v86 = vld [vmem:[%s0 + $0x8] sm:$0xf]
  %v87 = vld [vmem:[%s0 + $0xc] sm:$0xf]
  %v88 = vld [vmem:[%s2] sm:$0x1]
  %v93 = vunpack.c.l.b16 %v84
  %v94 = vunpack.c.l.b16 %v85
  %v95 = vunpack.c.l.b16 %v86
  %v96 = vunpack.c.l.b16 %v87
  %v97 = vpack.c.b16 %v94, %v93
  %v98 = vpack.c.b16 %v96, %v95
  %vm99 = vsmask.f32 256
  %v101 = vshrl.u32 %v97, 16
  %v103 = vrot.slane %v101, 7
  %v104 = vshll.u32 %v97, 16
  %v106 = vor.u32 %v103, %v104
  %v108 = vshrl.u32 %v98, 16
  %v110 = vrot.slane %v108, 7
  %v111 = vshll.u32 %v98, 16
  %v113 = vor.u32 %v110, %v111
  %v114 = vsel %vm99, %v103, %v113
  %vm117 = vcmask 1040384
  %vm118 = vmand %vm117, %vm99
  %v119 = vsel %vm118, 0, %v106
  %vm120 = vsmask.f32 7424
  %v121 = vrot.slane %v104, 1
  %v122 = vor.u32 %v101, %v121
  %v123 = vrot.slane %v111, 1
  %v124 = vsel %vm120, %v122, %v123
  %v125 = vor.u32 %v108, %v123
  %vm128 = vcmask 1047552
  %vm129 = vmand %vm128, %vm120
  %v130 = vsel %vm129, %v125, 0
  %v131 = vsel %vm76, 1, 0
  %v132 = vsel %vm77, 1, 0
  %v133 = vsel %vm78, 1, 0
  %v134 = vsel %vm79, 1, 0
  %vm135 = vcmp.eq.s32.totalorder %v131, 1
  %vm136 = vcmp.eq.s32.totalorder %v132, 1
  %vm137 = vcmp.eq.s32.totalorder %v133, 1
  %vm138 = vcmp.eq.s32.totalorder %v134, 1
  %vm139 = vmpackc.low %vm135, %vm135
  %vm140 = vmpackc.low %vm136, %vm136
  %vm141 = vmpackc.low %vm137, %vm137
  %vm142 = vmpackc.low %vm138, %vm138
  %v143 = vsel %vm139, 65537, 0
  %v144 = vsel %vm140, 65537, 0
  %v145 = vsel %vm141, 65537, 0
  %v146 = vsel %vm142, 65537, 0
  %v147 = vunpack.c.l.b16 %v143
  %v148 = vunpack.c.l.b16 %v144
  %v149 = vunpack.c.l.b16 %v145
  %v150 = vunpack.c.l.b16 %v146
  %v151 = vpack.c.b16 %v148, %v147
  %v152 = vpack.c.b16 %v150, %v149
  %vm153 = vcmp.ne.s16.totalorder %v151, 0
  %vm154 = vcmp.ne.s16.totalorder %v152, 0
  %v155 = vsel %vm153, %v119, 0
  %v156 = vsel %vm154, %v114, 0
  %v157 = vsel %vm80, 1, 0
  %v158 = vsel %vm81, 1, 0
  %v159 = vsel %vm82, 1, 0
  %v160 = vsel %vm83, 1, 0
  %vm161 = vcmp.eq.s32.totalorder %v157, 1
  %vm162 = vcmp.eq.s32.totalorder %v158, 1
  %vm163 = vcmp.eq.s32.totalorder %v159, 1
  %vm164 = vcmp.eq.s32.totalorder %v160, 1
  %vm165 = vmpackc.low %vm161, %vm161
  %vm166 = vmpackc.low %vm162, %vm162
  %vm167 = vmpackc.low %vm163, %vm163
  %vm168 = vmpackc.low %vm164, %vm164
  %v169 = vsel %vm165, 65537, 0
  %v170 = vsel %vm166, 65537, 0
  %v171 = vsel %vm167, 65537, 0
  %v172 = vsel %vm168, 65537, 0
  %v173 = vunpack.c.l.b16 %v169
  %v174 = vunpack.c.l.b16 %v170
  %v175 = vunpack.c.l.b16 %v171
  %v176 = vunpack.c.l.b16 %v172
  %v177 = vpack.c.b16 %v174, %v173
  %v178 = vpack.c.b16 %v176, %v175
  %vm179 = vcmp.ne.s16.totalorder %v177, 0
  %vm180 = vcmp.ne.s16.totalorder %v178, 0
  %v181 = vsel %vm179, %v124, 0
  %v182 = vsel %vm180, %v130, 0
  %183 = vrot.lane.b32.xlu0 %v97, 64
  %v184 = vpop.permute.xlu0 %183
  %185 = vrot.lane.b32.xlu0 %v98, 64
  %v186 = vpop.permute.xlu0 %185
  %vm187 = vcmask 523264
  %v190 = vsel %vm187, %v155, %v184
  %v194 = vsel %vm187, %v156, %v186
  %v196 = vld [vmem:[%s1] sm:$0xf]
  %v197 = vld [vmem:[%s1 + $0x4] sm:$0xf]
  %v198 = vld [vmem:[%s1 + $0x8] sm:$0xf]
  %v199 = vld [vmem:[%s1 + $0xc] sm:$0xf]
  %v200 = vld [vmem:[%s1 + $0x10] sm:$0xf]
  %v201 = vld [vmem:[%s1 + $0x14] sm:$0xf]
  %v202 = vld [vmem:[%s1 + $0x18] sm:$0xf]
  %v203 = vld [vmem:[%s1 + $0x1c] sm:$0xf]
  %v204 = vld [vmem:[%s1 + $0x20] sm:$0xf]
  %v205 = vld [vmem:[%s1 + $0x24] sm:$0xf]
  %v206 = vld [vmem:[%s1 + $0x28] sm:$0xf]
  %v207 = vld [vmem:[%s1 + $0x2c] sm:$0xf]
  %v208 = vld [vmem:[%s1 + $0x30] sm:$0xf]
  %v209 = vld [vmem:[%s1 + $0x34] sm:$0xf]
  %v210 = vld [vmem:[%s1 + $0x38] sm:$0xf]
  %v211 = vld [vmem:[%s1 + $0x3c] sm:$0xf]
  %v212 = vld [vmem:[%s1 + $0x40] sm:$0xf]
  %v213 = vld [vmem:[%s1 + $0x44] sm:$0xf]
  %v214 = vld [vmem:[%s1 + $0x48] sm:$0xf]
  %v215 = vld [vmem:[%s1 + $0x4c] sm:$0xf]
  %v216 = vld [vmem:[%s1 + $0x50] sm:$0xf]
  %v217 = vld [vmem:[%s1 + $0x54] sm:$0xf]
  %v218 = vld [vmem:[%s1 + $0x58] sm:$0xf]
  %v219 = vld [vmem:[%s1 + $0x5c] sm:$0xf]
  %v221 = vlaneseq
  %v222 = vshrl.u32 %v221, 7
  %v223 = vsub.s32 0, %v222
  %v224 = vrot.slane %v88, %v223
  %v250 = vunpack.c.l.b16 %v196
  %v251 = vunpack.c.l.b16 %v197
  %v252 = vunpack.c.l.b16 %v198
  %v253 = vunpack.c.l.b16 %v199
  %v254 = vunpack.c.l.b16 %v200
  %v255 = vunpack.c.l.b16 %v201
  %v256 = vunpack.c.l.b16 %v202
  %v257 = vunpack.c.l.b16 %v203
  %v258 = vunpack.c.l.b16 %v204
  %v259 = vunpack.c.l.b16 %v205
  %v260 = vunpack.c.l.b16 %v206
  %v261 = vunpack.c.l.b16 %v207
  %v262 = vunpack.c.l.b16 %v208
  %v263 = vunpack.c.l.b16 %v209
  %v264 = vunpack.c.l.b16 %v210
  %v265 = vunpack.c.l.b16 %v211
  %v266 = vunpack.c.l.b16 %v212
  %v267 = vunpack.c.l.b16 %v213
  %v268 = vunpack.c.l.b16 %v214
  %v269 = vunpack.c.l.b16 %v215
  %v270 = vunpack.c.l.b16 %v216
  %v271 = vunpack.c.l.b16 %v217
  %v272 = vunpack.c.l.b16 %v218
  %v273 = vunpack.c.l.b16 %v219
  %v274 = vpack.c.b16 %v251, %v250
  %v275 = vpack.c.b16 %v253, %v252
  %v276 = vpack.c.b16 %v255, %v254
  %v277 = vpack.c.b16 %v257, %v256
  %v278 = vpack.c.b16 %v259, %v258
  %v279 = vpack.c.b16 %v261, %v260
  %v280 = vpack.c.b16 %v263, %v262
  %v281 = vpack.c.b16 %v265, %v264
  %v282 = vpack.c.b16 %v267, %v266
  %v283 = vpack.c.b16 %v269, %v268
  %v284 = vpack.c.b16 %v271, %v270
  %v285 = vpack.c.b16 %v273, %v272
  %v299 = vsel %vm187, %v181, 0
  %v302 = vsel %vm187, %v182, 0
  %304 = vmatprep.subr.bf16.mxu0 0
  %305 = vmatpush1.bf16.msra.mxu0 %v281
  %306 = vmatprep.subr.bf16.mxu0 0
  %307 = vmatpush1.bf16.msra.mxu0 %v280
  %308 = vmatprep.subr.bf16.mxu0 0
  %309 = vmatpush1.bf16.msra.mxu0 %v279
  %310 = vmatprep.subr.bf16.mxu0 0
  %311 = vmatpush1.bf16.msra.mxu0 %v278
  %312 = vmatprep.subr.bf16.mxu0 0
  %313 = vmatpush1.bf16.msra.mxu0 %v277
  %314 = vmatprep.subr.bf16.mxu0 0
  %315 = vmatpush1.bf16.msra.mxu0 %v276
  %316 = vmatprep.subr.bf16.mxu0 0
  %317 = vmatpush1.bf16.msra.mxu0 %v275
  %318 = vmatprep.subr.bf16.mxu0 0
  %319 = vmatpush1.bf16.msra.mxu0 %v274
  %320 = vmatprep.subr.bf16.mxu0 0
  %321 = vmatpush2.bf16.msra.mxu0 0
  %322 = vmatprep.subr.bf16.mxu0 0
  %323 = vmatpush2.bf16.msra.mxu0 0
  %324 = vmatprep.subr.bf16.mxu0 0
  %325 = vmatpush2.bf16.msra.mxu0 0
  %326 = vmatprep.subr.bf16.mxu0 0
  %327 = vmatpush2.bf16.msra.mxu0 0
  %328 = vmatprep.subr.bf16.mxu0 0
  %329 = vmatpush2.bf16.msra.mxu0 %v285
  %330 = vmatprep.subr.bf16.mxu0 0
  %331 = vmatpush2.bf16.msra.mxu0 %v284
  %332 = vmatprep.subr.bf16.mxu0 0
  %333 = vmatpush2.bf16.msra.mxu0 %v283
  %334 = vmatprep.subr.bf16.mxu0 0
  %335 = vmatpush2.bf16.msra.mxu0 %v282
  %336 = vmatprep.mubr.bf16.mxu0 %v299
  %337 = vmatmul.mubr.bf16.gmra.mxu0 %v190
  %v338 = vpop.f32.mrf.mxu0
  %v339 = vadd.f32 %v224, %v338
  %v340 = vpop.f32.mrf.mxu0
  %v341 = vpop.f32.mrf.mxu0
  %v342 = vadd.f32 %v224, %v341
  %v343 = vpop.f32.mrf.mxu0
  %344 = vmatprep.mubr.bf16.mxu0 %v302
  %345 = vmatmul.mubr.bf16.gmra.mxu0 %v194
  %v346 = vpop.f32.mrf.mxu0
  %v347 = vadd.f32 %v224, %v346
  %v348 = vpop.f32.mrf.mxu0
  %v349 = vpop.f32.mrf.mxu0
  %v350 = vadd.f32 %v224, %v349
  %v351 = vpop.f32.mrf.mxu0
  %352 = vdwg.mxu0
  %vm353 = vcmp.ge.f32.partialorder %v339, 0.0
  %vm354 = vcmp.ge.f32.partialorder %v342, 0.0
  %vm355 = vcmp.ge.f32.partialorder %v347, 0.0
  %vm356 = vcmp.ge.f32.partialorder %v350, 0.0
  %v357 = vmul.f32 %v339, -0.2
  %v358 = vmul.f32 %v342, -0.2
  %v359 = vmul.f32 %v347, -0.2
  %v360 = vmul.f32 %v350, -0.2
  %v361 = vsel %vm353, %v339, %v357
  %v362 = vsel %vm354, %v342, %v358
  %v363 = vsel %vm355, %v347, %v359
  %v364 = vsel %vm356, %v350, %v360
  %v365 = vpack.c.bf16 %v362, %v361
  %v366 = vpack.c.bf16 %v364, %v363
  %v367 = vld [vmem:[%s4] sm:$0x1]
  %v369 = vshrl.u32 %v365, 16
  %v371 = vrot.slane %v369, 7
  %v372 = vshll.u32 %v365, 16
  %v374 = vor.u32 %v371, %v372
  %v376 = vshrl.u32 %v366, 16
  %v378 = vrot.slane %v376, 7
  %v379 = vshll.u32 %v366, 16
  %v381 = vor.u32 %v378, %v379
  %v382 = vsel %vm99, %v371, %v381
  %v385 = vsel %vm118, 0, %v374
  %v386 = vrot.slane %v372, 1
  %v387 = vor.u32 %v369, %v386
  %v388 = vrot.slane %v379, 1
  %v389 = vsel %vm120, %v387, %v388
  %v390 = vor.u32 %v376, %v388
  %v393 = vsel %vm129, %v390, 0
  %v394 = vsel %vm153, %v385, 0
  %v395 = vsel %vm154, %v382, 0
  %v396 = vsel %vm179, %v389, 0
  %v397 = vsel %vm180, %v393, 0
  %v398 = vld [vmem:[%s3] sm:$0xf]
  %v399 = vld [vmem:[%s3 + $0x4] sm:$0xf]
  %v400 = vld [vmem:[%s3 + $0x8] sm:$0xf]
  %v401 = vld [vmem:[%s3 + $0xc] sm:$0xf]
  %v402 = vld [vmem:[%s3 + $0x10] sm:$0xf]
  %v403 = vld [vmem:[%s3 + $0x14] sm:$0xf]
  %v404 = vld [vmem:[%s3 + $0x18] sm:$0xf]
  %v405 = vld [vmem:[%s3 + $0x1c] sm:$0xf]
  %v406 = vld [vmem:[%s3 + $0x20] sm:$0xf]
  %v407 = vld [vmem:[%s3 + $0x24] sm:$0xf]
  %v408 = vld [vmem:[%s3 + $0x28] sm:$0xf]
  %v409 = vld [vmem:[%s3 + $0x2c] sm:$0xf]
  %v410 = vld [vmem:[%s3 + $0x30] sm:$0xf]
  %v411 = vld [vmem:[%s3 + $0x34] sm:$0xf]
  %v412 = vld [vmem:[%s3 + $0x38] sm:$0xf]
  %v413 = vld [vmem:[%s3 + $0x3c] sm:$0xf]
  %v414 = vld [vmem:[%s3 + $0x40] sm:$0xf]
  %v415 = vld [vmem:[%s3 + $0x44] sm:$0xf]
  %v416 = vld [vmem:[%s3 + $0x48] sm:$0xf]
  %v417 = vld [vmem:[%s3 + $0x4c] sm:$0xf]
  %v418 = vld [vmem:[%s3 + $0x50] sm:$0xf]
  %v419 = vld [vmem:[%s3 + $0x54] sm:$0xf]
  %v420 = vld [vmem:[%s3 + $0x58] sm:$0xf]
  %v421 = vld [vmem:[%s3 + $0x5c] sm:$0xf]
  %v422 = vld [vmem:[%s3 + $0x60] sm:$0xf]
  %v423 = vld [vmem:[%s3 + $0x64] sm:$0xf]
  %v424 = vld [vmem:[%s3 + $0x68] sm:$0xf]
  %v425 = vld [vmem:[%s3 + $0x6c] sm:$0xf]
  %v426 = vld [vmem:[%s3 + $0x70] sm:$0xf]
  %v427 = vld [vmem:[%s3 + $0x74] sm:$0xf]
  %v428 = vld [vmem:[%s3 + $0x78] sm:$0xf]
  %v429 = vld [vmem:[%s3 + $0x7c] sm:$0xf]
  %v430 = vld [vmem:[%s3 + $0x80] sm:$0xf]
  %v431 = vld [vmem:[%s3 + $0x84] sm:$0xf]
  %v432 = vld [vmem:[%s3 + $0x88] sm:$0xf]
  %v433 = vld [vmem:[%s3 + $0x8c] sm:$0xf]
  %v434 = vld [vmem:[%s3 + $0x90] sm:$0xf]
  %v435 = vld [vmem:[%s3 + $0x94] sm:$0xf]
  %v436 = vld [vmem:[%s3 + $0x98] sm:$0xf]
  %v437 = vld [vmem:[%s3 + $0x9c] sm:$0xf]
  %v438 = vld [vmem:[%s3 + $0xa0] sm:$0xf]
  %v439 = vld [vmem:[%s3 + $0xa4] sm:$0xf]
  %v440 = vld [vmem:[%s3 + $0xa8] sm:$0xf]
  %v441 = vld [vmem:[%s3 + $0xac] sm:$0xf]
  %v442 = vld [vmem:[%s3 + $0xb0] sm:$0xf]
  %v443 = vld [vmem:[%s3 + $0xb4] sm:$0xf]
  %v444 = vld [vmem:[%s3 + $0xb8] sm:$0xf]
  %v445 = vld [vmem:[%s3 + $0xbc] sm:$0xf]
  %v447 = vlaneseq
  %v448 = vshrl.u32 %v447, 7
  %v449 = vsub.s32 0, %v448
  %v450 = vrot.slane %v367, %v449
  %v500 = vunpack.c.l.b16 %v398
  %v501 = vunpack.c.l.b16 %v399
  %v502 = vunpack.c.l.b16 %v400
  %v503 = vunpack.c.l.b16 %v401
  %v504 = vunpack.c.l.b16 %v402
  %v505 = vunpack.c.l.b16 %v403
  %v506 = vunpack.c.l.b16 %v404
  %v507 = vunpack.c.l.b16 %v405
  %v508 = vunpack.c.l.b16 %v406
  %v509 = vunpack.c.l.b16 %v407
  %v510 = vunpack.c.l.b16 %v408
  %v511 = vunpack.c.l.b16 %v409
  %v512 = vunpack.c.l.b16 %v410
  %v513 = vunpack.c.l.b16 %v411
  %v514 = vunpack.c.l.b16 %v412
  %v515 = vunpack.c.l.b16 %v413
  %v516 = vunpack.c.l.b16 %v414
  %v517 = vunpack.c.l.b16 %v415
  %v518 = vunpack.c.l.b16 %v416
  %v519 = vunpack.c.l.b16 %v417
  %v520 = vunpack.c.l.b16 %v418
  %v521 = vunpack.c.l.b16 %v419
  %v522 = vunpack.c.l.b16 %v420
  %v523 = vunpack.c.l.b16 %v421
  %v524 = vunpack.c.l.b16 %v422
  %v525 = vunpack.c.l.b16 %v423
  %v526 = vunpack.c.l.b16 %v424
  %v527 = vunpack.c.l.b16 %v425
  %v528 = vunpack.c.l.b16 %v426
  %v529 = vunpack.c.l.b16 %v427
  %v530 = vunpack.c.l.b16 %v428
  %v531 = vunpack.c.l.b16 %v429
  %v532 = vunpack.c.l.b16 %v430
  %v533 = vunpack.c.l.b16 %v431
  %v534 = vunpack.c.l.b16 %v432
  %v535 = vunpack.c.l.b16 %v433
  %v536 = vunpack.c.l.b16 %v434
  %v537 = vunpack.c.l.b16 %v435
  %v538 = vunpack.c.l.b16 %v436
  %v539 = vunpack.c.l.b16 %v437
  %v540 = vunpack.c.l.b16 %v438
  %v541 = vunpack.c.l.b16 %v439
  %v542 = vunpack.c.l.b16 %v440
  %v543 = vunpack.c.l.b16 %v441
  %v544 = vunpack.c.l.b16 %v442
  %v545 = vunpack.c.l.b16 %v443
  %v546 = vunpack.c.l.b16 %v444
  %v547 = vunpack.c.l.b16 %v445
  %v548 = vpack.c.b16 %v501, %v500
  %v549 = vpack.c.b16 %v503, %v502
  %v550 = vpack.c.b16 %v505, %v504
  %v551 = vpack.c.b16 %v507, %v506
  %v552 = vpack.c.b16 %v509, %v508
  %v553 = vpack.c.b16 %v511, %v510
  %v554 = vpack.c.b16 %v513, %v512
  %v555 = vpack.c.b16 %v515, %v514
  %v556 = vpack.c.b16 %v517, %v516
  %v557 = vpack.c.b16 %v519, %v518
  %v558 = vpack.c.b16 %v521, %v520
  %v559 = vpack.c.b16 %v523, %v522
  %v560 = vpack.c.b16 %v525, %v524
  %v561 = vpack.c.b16 %v527, %v526
  %v562 = vpack.c.b16 %v529, %v528
  %v563 = vpack.c.b16 %v531, %v530
  %v564 = vpack.c.b16 %v533, %v532
  %v565 = vpack.c.b16 %v535, %v534
  %v566 = vpack.c.b16 %v537, %v536
  %v567 = vpack.c.b16 %v539, %v538
  %v568 = vpack.c.b16 %v541, %v540
  %v569 = vpack.c.b16 %v543, %v542
  %v570 = vpack.c.b16 %v545, %v544
  %v571 = vpack.c.b16 %v547, %v546
  %596 = vmatprep.subr.bf16.mxu0 0
  %597 = vmatpush1.bf16.msra.mxu0 %v555
  %598 = vmatprep.subr.bf16.mxu0 0
  %599 = vmatpush1.bf16.msra.mxu0 %v554
  %600 = vmatprep.subr.bf16.mxu0 0
  %601 = vmatpush1.bf16.msra.mxu0 %v553
  %602 = vmatprep.subr.bf16.mxu0 0
  %603 = vmatpush1.bf16.msra.mxu0 %v552
  %604 = vmatprep.subr.bf16.mxu0 0
  %605 = vmatpush1.bf16.msra.mxu0 %v551
  %606 = vmatprep.subr.bf16.mxu0 0
  %607 = vmatpush1.bf16.msra.mxu0 %v550
  %608 = vmatprep.subr.bf16.mxu0 0
  %609 = vmatpush1.bf16.msra.mxu0 %v549
  %610 = vmatprep.subr.bf16.mxu0 0
  %611 = vmatpush1.bf16.msra.mxu0 %v548
  %612 = vmatprep.subr.bf16.mxu0 0
  %613 = vmatpush2.bf16.msra.mxu0 %v563
  %614 = vmatprep.subr.bf16.mxu0 0
  %615 = vmatpush2.bf16.msra.mxu0 %v562
  %616 = vmatprep.subr.bf16.mxu0 0
  %617 = vmatpush2.bf16.msra.mxu0 %v561
  %618 = vmatprep.subr.bf16.mxu0 0
  %619 = vmatpush2.bf16.msra.mxu0 %v560
  %620 = vmatprep.subr.bf16.mxu0 0
  %621 = vmatpush2.bf16.msra.mxu0 %v559
  %622 = vmatprep.subr.bf16.mxu0 0
  %623 = vmatpush2.bf16.msra.mxu0 %v558
  %624 = vmatprep.subr.bf16.mxu0 0
  %625 = vmatpush2.bf16.msra.mxu0 %v557
  %626 = vmatprep.subr.bf16.mxu0 0
  %627 = vmatpush2.bf16.msra.mxu0 %v556
  %628 = vmatprep.mubr.bf16.mxu0 %v365
  %629 = vmatmul.mubr.bf16.gmra.mxu0 %v394
  %v630 = vpop.f32.mrf.mxu0
  %v631 = vadd.f32 %v450, %v630
  %v632 = vpop.f32.mrf.mxu0
  %v633 = vpop.f32.mrf.mxu0
  %v634 = vadd.f32 %v450, %v633
  %v635 = vpop.f32.mrf.mxu0
  %636 = vmatprep.mubr.bf16.mxu0 %v366
  %637 = vmatmul.mubr.bf16.gmra.mxu0 %v395
  %v638 = vpop.f32.mrf.mxu0
  %v639 = vadd.f32 %v450, %v638
  %v640 = vpop.f32.mrf.mxu0
  %v641 = vpop.f32.mrf.mxu0
  %v642 = vadd.f32 %v450, %v641
  %v643 = vpop.f32.mrf.mxu0
  %644 = vdwg.mxu0
  %645 = vmatprep.subr.bf16.mxu0 0
  %646 = vmatpush1.bf16.msra.mxu0 %v571
  %647 = vmatprep.subr.bf16.mxu0 0
  %648 = vmatpush1.bf16.msra.mxu0 %v570
  %649 = vmatprep.subr.bf16.mxu0 0
  %650 = vmatpush1.bf16.msra.mxu0 %v569
  %651 = vmatprep.subr.bf16.mxu0 0
  %652 = vmatpush1.bf16.msra.mxu0 %v568
  %653 = vmatprep.subr.bf16.mxu0 0
  %654 = vmatpush1.bf16.msra.mxu0 %v567
  %655 = vmatprep.subr.bf16.mxu0 0
  %656 = vmatpush1.bf16.msra.mxu0 %v566
  %657 = vmatprep.subr.bf16.mxu0 0
  %658 = vmatpush1.bf16.msra.mxu0 %v565
  %659 = vmatprep.subr.bf16.mxu0 0
  %660 = vmatpush1.bf16.msra.mxu0 %v564
  %661 = vmatprep.subr.bf16.mxu0 0
  %662 = vmatpush2.bf16.msra.mxu0 0
  %663 = vmatprep.subr.bf16.mxu0 0
  %664 = vmatpush2.bf16.msra.mxu0 0
  %665 = vmatprep.subr.bf16.mxu0 0
  %666 = vmatpush2.bf16.msra.mxu0 0
  %667 = vmatprep.subr.bf16.mxu0 0
  %668 = vmatpush2.bf16.msra.mxu0 0
  %669 = vmatprep.subr.bf16.mxu0 0
  %670 = vmatpush2.bf16.msra.mxu0 0
  %671 = vmatprep.subr.bf16.mxu0 0
  %672 = vmatpush2.bf16.msra.mxu0 0
  %673 = vmatprep.subr.bf16.mxu0 0
  %674 = vmatpush2.bf16.msra.mxu0 0
  %675 = vmatprep.subr.bf16.mxu0 0
  %676 = vmatpush2.bf16.msra.mxu0 0
  %677 = vmatprep.mubr.bf16.mxu0 0
  %678 = vmatmul.mubr.bf16.gmra.mxu0 %v396
  %v679 = vpop.f32.mrf.mxu0
  %v680 = vadd.f32 %v631, %v679
  %v681 = vpop.f32.mrf.mxu0
  %v682 = vpop.f32.mrf.mxu0
  %v683 = vadd.f32 %v634, %v682
  %v684 = vpop.f32.mrf.mxu0
  %685 = vmatprep.mubr.bf16.mxu0 0
  %686 = vmatmul.mubr.bf16.gmra.mxu0 %v397
  %v687 = vpop.f32.mrf.mxu0
  %v688 = vadd.f32 %v639, %v687
  %v689 = vpop.f32.mrf.mxu0
  %v690 = vpop.f32.mrf.mxu0
  %v691 = vadd.f32 %v642, %v690
  %v692 = vpop.f32.mrf.mxu0
  %693 = vdwg.mxu0
  %vm694 = vcmp.ge.f32.partialorder %v680, 0.0
  %vm695 = vcmp.ge.f32.partialorder %v683, 0.0
  %vm696 = vcmp.ge.f32.partialorder %v688, 0.0
  %vm697 = vcmp.ge.f32.partialorder %v691, 0.0
  %v698 = vmul.f32 %v680, -0.2
  %v699 = vmul.f32 %v683, -0.2
  %v700 = vmul.f32 %v688, -0.2
  %v701 = vmul.f32 %v691, -0.2
  %v702 = vsel %vm694, %v680, %v698
  %v703 = vsel %vm695, %v683, %v699
  %v704 = vsel %vm696, %v688, %v700
  %v705 = vsel %vm697, %v691, %v701
  %706 = vst [vmem:[%s5] sm:$0xff] %v702
  %707 = vst [vmem:[%s5 + $0x8] sm:$0xff] %v703
  %708 = vst [vmem:[%s5 + $0x10] sm:$0xff] %v704
  %709 = vst [vmem:[%s5 + $0x18] sm:$0xff] %v705
  // Predicated region
  $region22: #{very_simple_unet_block.1} parent=0 // pred_check
    _
  $region23: #{very_simple_unet_block.1} parent=0 // pred_check_branch
    %711 = sbr.rel (0) target = $region25
  $region24: #{very_simple_unet_block.1} parent=0 // pred_region
    _
  $region25: #{very_simple_unet_block.1} parent=0 // pred_fallthru
    _
  // Predicated region
  $region26: #{very_simple_unet_block.1} parent=0 // pred_check
    _
  $region27: #{very_simple_unet_block.1} parent=0 // pred_check_branch
    %713 = sbr.rel (0) target = $region29
  $region28: #{very_simple_unet_block.1} parent=0 // pred_region
    _
  $region29: #{very_simple_unet_block.1} parent=0 // pred_fallthru
    _

</llo_original>
